<compile_context>
chip_gen: v7x
topology: tpu7x:2x2x1
jax: 0.10.0
libtpu: 0.0.40
codegen_flags: <defaults>
</compile_context>

<pallas_src>
import functools

import jax
import jax.numpy as jnp
from jax.experimental import pallas as pl
from jax.experimental.pallas import tpu as pltpu


def _mixed_loss_tile_kernel(logits_ref, label_ref, ce_ref, num_ref, den_ref, *,
                            tp, inner_tiles, total_pixels, needs_mask):
    """Processes one (N, C, TP) logits tile / (N, TP) label tile.

    Accumulates, per core (outer grid axis):
      ce_ref  (1,1,1): sum over pixels of  log(sum_c exp(shifted)) - shifted[label]
      num_ref (1,N,C): sum over pixels of  softmax(logits)[c] * onehot[c]
      den_ref (1,N,C): sum over pixels of  softmax(logits)[c]^2 + onehot[c]
    """
    i = pl.program_id(1)

    @pl.when(i == 0)
    def _init():
        ce_ref[...] = jnp.zeros_like(ce_ref)
        num_ref[...] = jnp.zeros_like(num_ref)
        den_ref[...] = jnp.zeros_like(den_ref)

    logits = logits_ref[...].astype(jnp.float32)       # (N, C, TP)
    labels = label_ref[...]                            # (N, TP) int32
    n, c, _ = logits.shape

    # Numerically stable softmax over the class (sublane) axis.
    m = jnp.max(logits, axis=1, keepdims=True)         # (N, 1, TP)
    shifted = logits - m
    e = jnp.exp(shifted)
    s = jnp.sum(e, axis=1, keepdims=True)               # (N, 1, TP)
    # EUP approximate reciprocal (free slot) + one Newton step for accuracy;
    # only N*TP reciprocals instead of an (N,C,TP) divide.
    inv_s = pl.reciprocal(s, approx=True)
    inv_s = inv_s * (2.0 - s * inv_s)
    probs = e * inv_s                                   # (N, C, TP)
    log_s = jnp.log(s)                                  # (N, 1, TP)

    # One-hot "match" built on the fly (bool); no f32 onehot tensor and no
    # onehot**2 (onehot^2 == onehot; its pixel-sum is the per-class count).
    class_ids = jax.lax.broadcasted_iota(jnp.int32, (n, c, tp), 1)
    match = class_ids == labels[:, None, :]             # (N, C, TP) bool

    if needs_mask:
        # Ragged last tile / core-rounding overhang: mask pixels past the true
        # pixel count so padded/garbage lanes contribute exactly zero.
        start = (pl.program_id(0) * inner_tiles + i) * tp
        lane = jax.lax.broadcasted_iota(jnp.int32, (n, tp), 1)
        valid = (start + lane) < total_pixels            # (N, TP)
        valid3 = valid[:, None, :]                       # (N, 1, TP)
        match = jnp.logical_and(match, valid3)
        log_s = jnp.where(valid3, log_s, 0.0)
        psq = jnp.where(valid3, probs * probs, 0.0)
    else:
        psq = probs * probs

    # --- CrossEntropy partial: sum(log s) - sum(shifted at label) ------------
    ce_tile = jnp.sum(log_s) - jnp.sum(jnp.where(match, shifted, 0.0))
    ce_ref[...] += ce_tile

    # --- Dice partials per (batch, class) -------------------------------------
    num_ref[0] += jnp.sum(jnp.where(match, probs, 0.0), axis=2)
    den_ref[0] += jnp.sum(psq + match.astype(jnp.float32), axis=2)


def mixed_loss(cls_score, label, each_loss_weight=None, smooth=1.0,
               tile_pixels=2048, num_cores=2, vmem_limit_bytes=None):
    """cls_score: (N, C, H, W) float (f32 or bf16); label: (N, H, W) int -> scalar.

    tile_pixels: pixel-tile size streamed through VMEM (rounded to a multiple
      of 128).  ~2048-4096 is a safe default for v7x's 64 MiB VMEM; on
      v5e/v6e (128 MiB) it can be raised (optionally with vmem_limit_bytes)
      to amortize per-grid-step overhead.
    num_cores: leading "parallel" grid axis so the pixel loop is split across
      TensorCores (v7x has 2 per chip); per-core partials are reduced in a
      tiny XLA epilogue.
    """
    if each_loss_weight is None:
        each_loss_weight = {"CrossEntropy": 1.0, "Dice": 1.0}
    w_ce = float(each_loss_weight["CrossEntropy"])
    w_dice = float(each_loss_weight["Dice"])

    N, C, H, W = cls_score.shape
    P = H * W
    # Keep the logits dtype: bf16 stays bf16 in HBM (half the DMA traffic);
    # the kernel upcasts each tile to f32 internally.
    logits = cls_score.reshape(N, C, P)
    # TODO(synk): labels could be stored as int8/uint8 when C <= 255 to shave
    # a little more HBM traffic; kept int32 here.
    labels = label.reshape(N, P).astype(jnp.int32)

    # --- choose a lane-aligned pixel tile and the 2-level grid ----------------
    if P <= tile_pixels:
        tp = P                                # single tile (block == full dim)
    else:
        tp = max(128, (tile_pixels // 128) * 128)
    num_tiles = pl.cdiv(P, tp)
    ncores = num_cores if num_tiles >= num_cores else 1
    inner = pl.cdiv(num_tiles, ncores)
    covered = ncores * inner * tp
    needs_mask = covered > P                  # ragged tail and/or core rounding
    overhang = ncores * inner > num_tiles     # duplicate tiles past the end

    def tile_index(o, i):
        t = o * inner + i
        if overhang:
            # Clamp duplicate/overhang tiles onto the last real tile; their
            # pixels are fully masked out inside the kernel.
            t = jnp.minimum(t, num_tiles - 1)
        return t

    kernel = functools.partial(
        _mixed_loss_tile_kernel,
        tp=tp, inner_tiles=inner, total_pixels=P, needs_mask=needs_mask)

    cp_kwargs = dict(dimension_semantics=("parallel", "arbitrary"))
    if vmem_limit_bytes is not None:
        cp_kwargs["vmem_limit_bytes"] = int(vmem_limit_bytes)

    ce_part, num_part, den_part = pl.pallas_call(
        kernel,
        grid=(ncores, inner),
        in_specs=[
            pl.BlockSpec((N, C, tp), lambda o, i: (0, 0, tile_index(o, i))),
            pl.BlockSpec((N, tp), lambda o, i: (0, tile_index(o, i))),
        ],
        out_specs=(
            pl.BlockSpec((1, 1, 1), lambda o, i: (o, 0, 0)),
            pl.BlockSpec((1, N, C), lambda o, i: (o, 0, 0)),
            pl.BlockSpec((1, N, C), lambda o, i: (o, 0, 0)),
        ),
        out_shape=(
            jax.ShapeDtypeStruct((ncores, 1, 1), jnp.float32),
            jax.ShapeDtypeStruct((ncores, N, C), jnp.float32),
            jax.ShapeDtypeStruct((ncores, N, C), jnp.float32),
        ),
        compiler_params=pltpu.CompilerParams(**cp_kwargs),
    )(logits, labels)

    # --- tiny epilogue: combine per-core partials, apply the nonlinear dice ---
    ce = jnp.sum(ce_part) / float(N * P)                        # mean CE
    num = jnp.sum(num_part, axis=0)                             # (N, C)
    den = jnp.sum(den_part, axis=0)                             # (N, C)
    dice_nc = 1.0 - (2.0 * num + smooth) / (den + smooth)
    dice = jnp.sum(dice_nc) / float(N * C)
    return w_ce * ce + w_dice * dice


def _reference_mixed_loss(cls_score, label, each_loss_weight, smooth=1.0):
    """Pure-JAX reference for verification."""
    N, C, H, W = cls_score.shape
    logits = cls_score.reshape(N, C, -1).astype(jnp.float32)
    labels = label.reshape(N, -1)
    onehot = jax.nn.one_hot(labels, C, axis=1, dtype=jnp.float32)
    log_probs = jax.nn.log_softmax(logits, axis=1)
    probs = jax.nn.softmax(logits, axis=1)
    ce = -jnp.mean(jnp.sum(onehot * log_probs, axis=1))
    num = 2.0 * jnp.sum(probs * onehot, axis=2) + smooth
    den = jnp.sum(probs ** 2 + onehot ** 2, axis=2) + smooth
    dice = jnp.mean(jnp.sum(1.0 - num / den, axis=1) / C)
    return each_loss_weight["CrossEntropy"] * ce + each_loss_weight["Dice"] * dice


if __name__ == "__main__":
    key = jax.random.PRNGKey(0)
    k1, k2, k3, k4 = jax.random.split(key, 4)

    each_loss_weight = {"CrossEntropy": 1.0, "Dice": 3.0}

    # Tolerance is slightly looser than exact f32 to accommodate the EUP
    # approximate-reciprocal fast path (Newton-refined) and per-tile/per-core
    # accumulation order.
    RTOL = ATOL = 1e-4

    # Test 1: f32 logits, pixel count divisible by the tile
    # (exercises the 2-way "parallel" core split + multi-tile accumulation).
    N, C, H, W = 2, 4, 16, 16
    cls_score = jax.random.normal(k1, (N, C, H, W), dtype=jnp.float32)
    label = jax.random.randint(k2, (N, H, W), 0, C, dtype=jnp.int32)
    loss = mixed_loss(cls_score, label, each_loss_weight, tile_pixels=128)
    loss = jax.block_until_ready(loss)
    ref = _reference_mixed_loss(cls_score, label, each_loss_weight)
    assert jnp.isfinite(loss), "loss is not finite"
    assert jnp.allclose(loss, ref, rtol=RTOL, atol=ATOL), (loss, ref)

    # Test 2: bf16 logits, ragged pixel count
    # (exercises last-tile masking and the reduced-HBM-traffic bf16 path).
    N2, C2, H2, W2 = 2, 5, 12, 20
    cls2 = jax.random.normal(k3, (N2, C2, H2, W2), dtype=jnp.bfloat16)
    lab2 = jax.random.randint(k4, (N2, H2, W2), 0, C2, dtype=jnp.int32)
    loss2 = mixed_loss(cls2, lab2, each_loss_weight, tile_pixels=128)
    loss2 = jax.block_until_ready(loss2)
    ref2 = _reference_mixed_loss(cls2, lab2, each_loss_weight)
    assert jnp.isfinite(loss2), "loss2 is not finite"
    assert jnp.allclose(loss2, ref2, rtol=RTOL, atol=ATOL), (loss2, ref2)

    print("KERNEL_OK")
</pallas_src>

<mosaic_0001>
module attributes {stable_mosaic.version = 11 : i64} {
  func.func @_mixed_loss_tile_kernel(%arg0: i32, %arg1: i32, %arg2: memref<2x4x128xf32, #tpu.memory_space<vmem>>, %arg3: memref<2x128xi32, #tpu.memory_space<vmem>>, %arg4: memref<1x1x1xf32, #tpu.memory_space<vmem>>, %arg5: memref<1x2x4xf32, #tpu.memory_space<vmem>>, %arg6: memref<1x2x4xf32, #tpu.memory_space<vmem>>) attributes {dimension_semantics = [#tpu.dimension_semantics<parallel>, #tpu.dimension_semantics<arbitrary>], iteration_bounds = array<i64: 2, 1>, scalar_prefetch = 0 : i64, scratch_operands = 0 : i64, tpu.core_type = #tpu.core_type<tc>, window_params = [{transform_indices = @transform_0, window_bounds = array<i64: 2, 4, 128>}, {transform_indices = @transform_1, window_bounds = array<i64: 2, 128>}, {transform_indices = @transform_2, window_bounds = array<i64: 1, 1, 1>}, {transform_indices = @transform_3, window_bounds = array<i64: 1, 2, 4>}, {transform_indices = @transform_4, window_bounds = array<i64: 1, 2, 4>}]} {
    %c0_i32 = arith.constant 0 : i32
    %0 = arith.cmpi eq, %arg1, %c0_i32 : i32
    %1 = arith.extui %0 : i1 to i32
    %c0_i32_0 = arith.constant 0 : i32
    %2 = arith.cmpi ne, %1, %c0_i32_0 : i32
    scf.if %2 {
      %cst_31 = arith.constant 0.000000e+00 : f32
      %59 = vector.broadcast %cst_31 : f32 to vector<1x1x1xf32>
      %c0_32 = arith.constant 0 : index
      %c0_33 = arith.constant 0 : index
      %c0_34 = arith.constant 0 : index
      %60 = vector.load %arg4[%c0_32, %c0_33, %c0_34] : memref<1x1x1xf32, #tpu.memory_space<vmem>>, vector<1x1x1xf32>
      tpu.vector_store %arg4[%c0_32, %c0_33, %c0_34], %59 {strides = array<i32>} : memref<1x1x1xf32, #tpu.memory_space<vmem>>, vector<1x1x1xf32>,
      %cst_35 = arith.constant 0.000000e+00 : f32
      %61 = vector.broadcast %cst_35 : f32 to vector<1x2x4xf32>
      %c0_36 = arith.constant 0 : index
      %c0_37 = arith.constant 0 : index
      %c0_38 = arith.constant 0 : index
      %62 = vector.load %arg5[%c0_36, %c0_37, %c0_38] : memref<1x2x4xf32, #tpu.memory_space<vmem>>, vector<1x2x4xf32>
      tpu.vector_store %arg5[%c0_36, %c0_37, %c0_38], %61 {strides = array<i32>} : memref<1x2x4xf32, #tpu.memory_space<vmem>>, vector<1x2x4xf32>,
      %cst_39 = arith.constant 0.000000e+00 : f32
      %63 = vector.broadcast %cst_39 : f32 to vector<1x2x4xf32>
      %c0_40 = arith.constant 0 : index
      %c0_41 = arith.constant 0 : index
      %c0_42 = arith.constant 0 : index
      %64 = vector.load %arg6[%c0_40, %c0_41, %c0_42] : memref<1x2x4xf32, #tpu.memory_space<vmem>>, vector<1x2x4xf32>
      tpu.vector_store %arg6[%c0_40, %c0_41, %c0_42], %63 {strides = array<i32>} : memref<1x2x4xf32, #tpu.memory_space<vmem>>, vector<1x2x4xf32>,
    } else {
    }
    %c0 = arith.constant 0 : index
    %c0_1 = arith.constant 0 : index
    %c0_2 = arith.constant 0 : index
    %3 = vector.load %arg2[%c0, %c0_1, %c0_2] : memref<2x4x128xf32, #tpu.memory_space<vmem>>, vector<2x4x128xf32>
    %c0_3 = arith.constant 0 : index
    %c0_4 = arith.constant 0 : index
    %4 = vector.load %arg3[%c0_3, %c0_4] : memref<2x128xi32, #tpu.memory_space<vmem>>, vector<2x128xi32>
    %cst = arith.constant dense<0xFF800000> : vector<2x128xf32>
    %5 = vector.multi_reduction <maximumf>, %3, %cst [1] : vector<2x4x128xf32> to vector<2x128xf32>
    %6 = vector.shape_cast %5 : vector<2x128xf32> to vector<2x1x128xf32>
    %7 = vector.broadcast %6 : vector<2x1x128xf32> to vector<2x4x128xf32>
    %8 = arith.subf %3, %7 : vector<2x4x128xf32>
    %9 = math.exp %8 : vector<2x4x128xf32>
    %cst_5 = arith.constant dense<0.000000e+00> : vector<2x128xf32>
    %10 = vector.multi_reduction <add>, %9, %cst_5 [1] : vector<2x4x128xf32> to vector<2x128xf32>
    %11 = vector.shape_cast %10 : vector<2x128xf32> to vector<2x1x128xf32>
    %12 = tpu.reciprocal %11 {approx = true} : vector<2x1x128xf32> -> vector<2x1x128xf32>
    %13 = arith.mulf %11, %12 : vector<2x1x128xf32>
    %cst_6 = arith.constant 2.000000e+00 : f32
    %14 = vector.broadcast %cst_6 : f32 to vector<2x1x128xf32>
    %15 = arith.subf %14, %13 : vector<2x1x128xf32>
    %16 = arith.mulf %12, %15 : vector<2x1x128xf32>
    %17 = vector.broadcast %16 : vector<2x1x128xf32> to vector<2x4x128xf32>
    %18 = arith.mulf %9, %17 : vector<2x4x128xf32>
    %19 = math.log %11 : vector<2x1x128xf32>
    %20 = tpu.iota {dimensions = array<i32: 1>} : vector<2x4x128xi32>
    %21 = vector.shape_cast %4 : vector<2x128xi32> to vector<2x1x128xi32>
    %22 = vector.broadcast %21 : vector<2x1x128xi32> to vector<2x4x128xi32>
    %23 = arith.cmpi eq, %20, %22 : vector<2x4x128xi32>
    %24 = arith.mulf %18, %18 : vector<2x4x128xf32>
    %25 = vector.shape_cast %19 : vector<2x1x128xf32> to vector<1x2x1x128xf32>
    %cst_7 = arith.constant dense<0.000000e+00> : vector<1xf32>
    %26 = vector.multi_reduction <add>, %25, %cst_7 [1, 2, 3] : vector<1x2x1x128xf32> to vector<1xf32>
    %27 = vector.shape_cast %26 : vector<1xf32> to vector<1x1x1x1xf32>
    %28 = vector.extract %27[0, 0, 0, 0] : f32 from vector<1x1x1x1xf32>
    %cst_8 = arith.constant 0.000000e+00 : f32
    %29 = vector.broadcast %cst_8 : f32 to vector<2x4x128xf32>
    %30 = arith.select %23, %8, %29 : vector<2x4x128xi1>, vector<2x4x128xf32>
    %31 = vector.shape_cast %30 : vector<2x4x128xf32> to vector<1x2x4x128xf32>
    %cst_9 = arith.constant dense<0.000000e+00> : vector<1xf32>
    %32 = vector.multi_reduction <add>, %31, %cst_9 [1, 2, 3] : vector<1x2x4x128xf32> to vector<1xf32>
    %33 = vector.shape_cast %32 : vector<1xf32> to vector<1x1x1x1xf32>
    %34 = vector.extract %33[0, 0, 0, 0] : f32 from vector<1x1x1x1xf32>
    %35 = arith.subf %28, %34 : f32
    %c0_10 = arith.constant 0 : index
    %c0_11 = arith.constant 0 : index
    %c0_12 = arith.constant 0 : index
    %36 = vector.load %arg4[%c0_10, %c0_11, %c0_12] : memref<1x1x1xf32, #tpu.memory_space<vmem>>, vector<1x1x1xf32>
    %37 = vector.broadcast %35 : f32 to vector<1x1x1xf32>
    %38 = arith.addf %36, %37 : vector<1x1x1xf32>
    %c0_13 = arith.constant 0 : index
    %c0_14 = arith.constant 0 : index
    %c0_15 = arith.constant 0 : index
    %39 = vector.load %arg4[%c0_13, %c0_14, %c0_15] : memref<1x1x1xf32, #tpu.memory_space<vmem>>, vector<1x1x1xf32>
    tpu.vector_store %arg4[%c0_13, %c0_14, %c0_15], %38 {strides = array<i32>} : memref<1x1x1xf32, #tpu.memory_space<vmem>>, vector<1x1x1xf32>,
    %c0_16 = arith.constant 0 : index
    %c0_17 = arith.constant 0 : index
    %c0_18 = arith.constant 0 : index
    %40 = vector.load %arg5[%c0_16, %c0_17, %c0_18] : memref<1x2x4xf32, #tpu.memory_space<vmem>>, vector<1x2x4xf32>
    %41 = vector.shape_cast %40 : vector<1x2x4xf32> to vector<2x4xf32>
    %cst_19 = arith.constant 0.000000e+00 : f32
    %42 = vector.broadcast %cst_19 : f32 to vector<2x4x128xf32>
    %43 = arith.select %23, %18, %42 : vector<2x4x128xi1>, vector<2x4x128xf32>
    %cst_20 = arith.constant dense<0.000000e+00> : vector<2x4xf32>
    %44 = vector.multi_reduction <add>, %43, %cst_20 [2] : vector<2x4x128xf32> to vector<2x4xf32>
    %45 = arith.addf %41, %44 : vector<2x4xf32>
    %c0_21 = arith.constant 0 : index
    %c0_22 = arith.constant 0 : index
    %c0_23 = arith.constant 0 : index
    %46 = vector.load %arg5[%c0_21, %c0_22, %c0_23] : memref<1x2x4xf32, #tpu.memory_space<vmem>>, vector<1x2x4xf32>
    %47 = vector.shape_cast %46 : vector<1x2x4xf32> to vector<2x4xf32>
    %48 = vector.shape_cast %45 : vector<2x4xf32> to vector<1x2x4xf32>
    tpu.vector_store %arg5[%c0_21, %c0_22, %c0_23], %48 {strides = array<i32>} : memref<1x2x4xf32, #tpu.memory_space<vmem>>, vector<1x2x4xf32>,
    %c0_24 = arith.constant 0 : index
    %c0_25 = arith.constant 0 : index
    %c0_26 = arith.constant 0 : index
    %49 = vector.load %arg6[%c0_24, %c0_25, %c0_26] : memref<1x2x4xf32, #tpu.memory_space<vmem>>, vector<1x2x4xf32>
    %50 = vector.shape_cast %49 : vector<1x2x4xf32> to vector<2x4xf32>
    %51 = arith.extui %23 : vector<2x4x128xi1> to vector<2x4x128xi32>
    %52 = arith.sitofp %51 : vector<2x4x128xi32> to vector<2x4x128xf32>
    %53 = arith.addf %24, %52 : vector<2x4x128xf32>
    %cst_27 = arith.constant dense<0.000000e+00> : vector<2x4xf32>
    %54 = vector.multi_reduction <add>, %53, %cst_27 [2] : vector<2x4x128xf32> to vector<2x4xf32>
    %55 = arith.addf %50, %54 : vector<2x4xf32>
    %c0_28 = arith.constant 0 : index
    %c0_29 = arith.constant 0 : index
    %c0_30 = arith.constant 0 : index
    %56 = vector.load %arg6[%c0_28, %c0_29, %c0_30] : memref<1x2x4xf32, #tpu.memory_space<vmem>>, vector<1x2x4xf32>
    %57 = vector.shape_cast %56 : vector<1x2x4xf32> to vector<2x4xf32>
    %58 = vector.shape_cast %55 : vector<2x4xf32> to vector<1x2x4xf32>
    tpu.vector_store %arg6[%c0_28, %c0_29, %c0_30], %58 {strides = array<i32>} : memref<1x2x4xf32, #tpu.memory_space<vmem>>, vector<1x2x4xf32>,
    return
  }
  func.func @transform_0(%arg0: i32, %arg1: i32) -> (i32, i32, i32) {
    %c1_i32 = arith.constant 1 : i32
    %0 = arith.muli %arg0, %c1_i32 : i32
    %1 = arith.addi %0, %arg1 : i32
    %c0_i32 = arith.constant 0 : i32
    %c0_i32_0 = arith.constant 0 : i32
    %c0_i32_1 = arith.constant 0 : i32
    return %c0_i32, %c0_i32_0, %1 : i32, i32, i32
  }
  func.func @transform_1(%arg0: i32, %arg1: i32) -> (i32, i32) {
    %c1_i32 = arith.constant 1 : i32
    %0 = arith.muli %arg0, %c1_i32 : i32
    %1 = arith.addi %0, %arg1 : i32
    %c0_i32 = arith.constant 0 : i32
    %c0_i32_0 = arith.constant 0 : i32
    return %c0_i32, %1 : i32, i32
  }
  func.func @transform_2(%arg0: i32, %arg1: i32) -> (i32, i32, i32) {
    %c0_i32 = arith.constant 0 : i32
    %c0_i32_0 = arith.constant 0 : i32
    %c0_i32_1 = arith.constant 0 : i32
    return %arg0, %c0_i32, %c0_i32_0 : i32, i32, i32
  }
  func.func @transform_3(%arg0: i32, %arg1: i32) -> (i32, i32, i32) {
    %c0_i32 = arith.constant 0 : i32
    %c0_i32_0 = arith.constant 0 : i32
    %c0_i32_1 = arith.constant 0 : i32
    return %arg0, %c0_i32, %c0_i32_0 : i32, i32, i32
  }
  func.func @transform_4(%arg0: i32, %arg1: i32) -> (i32, i32, i32) {
    %c0_i32 = arith.constant 0 : i32
    %c0_i32_0 = arith.constant 0 : i32
    %c0_i32_1 = arith.constant 0 : i32
    return %arg0, %c0_i32, %c0_i32_0 : i32, i32, i32
  }
}

</mosaic_0001>

<llo_original>
// kernel: tpu_custom_call.1
$region0: #{tpu_custom_call.1}
  #allocation0 [shape = 'u32[]', space=smem, size = 0x4, offset = 0x4, fixed_abs, tag = 'smem constant byte address 0x4 - core index']
  #allocation1 [shape = 'u32[144,128]{1,0:T(1,128)}', space=vmem, size = 0x12000, scoped, tag = 'internal scratch']
  %s0 = inlined_call_operand.hbm [shape: f32[2,4,256], index: 0, kind: input, shape index: {}]
  %s1 = inlined_call_operand.hbm [shape: s32[2,256], index: 1, kind: input, shape index: {}]
  %s2 = inlined_call_operand.vmem [shape: f32[2,1,1], index: 2, kind: output, shape index: {0}]
  %s3 = inlined_call_operand.hbm [shape: f32[2,2,4], index: 3, kind: output, shape index: {1}]
  %s4 = inlined_call_operand.hbm [shape: f32[2,2,4], index: 4, kind: output, shape index: {2}]
  %5 = xla_tuple %s2, %s3, %s4
  %s6 = sld [smem:[#allocation0]]
  $region69: #{tpu_custom_call.1} parent=0
    _
  %s8 = ssub.s32 1, %s6
  %s9 = scalar_select 0, %s8, %s6
  $region1: #{tpu_custom_call.1} parent=0
    #allocation2 [shape = 'u8[8192]{0}', space=vmem, size = 0x2000, scoped, tag = 'input window, operand 0']
    #allocation3 [shape = 's32[2]{0}', space=sflag, size = 0x8, scoped, tag = 'scoped memory for tpu_custom_call.1']
    #allocation4 [shape = 's32[2]{0}', space=sflag, size = 0x8, scoped, tag = 'scoped memory for tpu_custom_call.1']
    #allocation5 [shape = 'u8[2048]{0}', space=vmem, size = 0x800, scoped, tag = 'input window, operand 1']
    #allocation6 [shape = 's32[2]{0}', space=sflag, size = 0x8, scoped, tag = 'scoped memory for tpu_custom_call.1']
    #allocation7 [shape = 'u8[2048]{0}', space=vmem, size = 0x800, scoped, tag = 'output window, operand 1']
    #allocation8 [shape = 'u8[2048]{0}', space=vmem, size = 0x800, scoped, tag = 'output window, operand 2']
    #allocation9 [shape = 's32[2]{0}', space=sflag, size = 0x8, scoped, tag = 'scoped memory for tpu_custom_call.1']
    %10 = vsyncpa [#allocation3], 0
    %s11 = scalar_lea.sflag [#allocation3], 1
    %12 = vsyncpa %s11, 0
    %13 = vsyncpa [#allocation6], 0
    %s14 = scalar_lea.sflag [#allocation6], 1
    %15 = vsyncpa %s14, 0
    %16 = vsyncpa [#allocation4], 0
    %s17 = scalar_lea.sflag [#allocation4], 1
    %18 = vsyncpa %s17, 0
    %19 = vsyncpa [#allocation9], 0
    %s20 = scalar_lea.sflag [#allocation9], 1
    %21 = vsyncpa %s20, 0
    loop: start=0, step=1, limit=4
    $region2: #{tpu_custom_call.1} parent=1 // loop_pre_header
      _
    $region3: #{tpu_custom_call.1} parent=1 // loop_header
      %s23 = sphi 0, %s27
      %p24 = scmp.ge.s32.totalorder %s23, 4
      %s30 = sphi 0, %s42
      %s31 = sphi 0, %s38
      %s32 = sphi 0, %s30
      %s33 = sphi 0, %s31
      %s34 = sphi 0, %s32
      %s35 = sphi 0, %s33
      %s47 = sphi 0, %s49
      %s50 = sphi 0, %s47
      %s51 = sphi 0, %s50
      %s67 = sphi 0, %s51
      %s75 = sphi 0, %s77
      %s78 = sphi 0, %s75
      %s79 = sphi 0, %s78
      %s95 = sphi 0, %s79
      %s101 = sphi 0, %s103
      %s104 = sphi 0, %s101
      %s105 = sphi 0, %s104
      %s121 = sphi 0, %s105
      %s127 = sphi 0, %s129
      %s130 = sphi 0, %s127
      %s131 = sphi 0, %s130
      %s147 = sphi 0, %s131
      %s153 = sphi 0, %s155
      %s156 = sphi 0, %s153
      %s157 = sphi 0, %s156
      %s173 = sphi 0, %s157
    $region4: #{tpu_custom_call.1} parent=1 // loop_header_branch
      %26 = sbr.rel (%p24) target = $region8
    $region5: #{tpu_custom_call.1} parent=1 // loop_body
      %s28 = ssub.s32 %s23, 1
      %s29 = ssub.s32 %s23, 2
      %s36 = sadd.s32 1, %s31
      %p37 = scmp.ge.s32.totalorder %s36, 1
      %s38 = scalar_select %p37, 0, %s36
      %s39 = sadd.s32 1, %s30
      %s40 = scalar_select %p37, %s39, %s30
      %p41 = scmp.ge.s32.totalorder %s40, 2
      %s42 = scalar_select %p41, 0, %s40
      %s43 = sadd.s32 %s30, %s31
      %s44 = sadd.s32 %s42, %s38
      %s45 = ssub.s32 %s43, %s44
      %p46 = scmp.eq.s32.totalorder %s45, 0
      %s48 = sadd.s32 %s47, 1
      %s49 = scalar_select %p46, %s47, %s48
      %p52 = pneg %p46
      %p53 = scmp.eq.s32.totalorder %s23, 1
      %p54 = por %p52, %p53
      %p55 = scmp.ne.s32.totalorder %s47, %s50
      %p56 = scmp.eq.s32.totalorder %s23, 0
      %p57 = por %p55, %p56
      %p58 = scmp.ne.s32.totalorder %s47, %s50
      %p59 = scmp.eq.s32.totalorder %s28, 1
      %p60 = por %p58, %p59
      %p61 = scmp.ne.s32.totalorder %s50, %s51
      %p62 = scmp.eq.s32.totalorder %s28, 0
      %p63 = por %p61, %p62
      %p64 = scmp.ne.s32.totalorder %s50, %s51
      %p65 = scmp.eq.s32.totalorder %s29, 1
      %p66 = por %p64, %p65
      %p68 = scmp.ne.s32.totalorder %s51, %s67
      %p69 = scmp.eq.s32.totalorder %s29, 0
      %p70 = por %p68, %p69
      %s71 = sadd.s32 %s30, %s31
      %s72 = sadd.s32 %s42, %s38
      %s73 = ssub.s32 %s71, %s72
      %p74 = scmp.eq.s32.totalorder %s73, 0
      %s76 = sadd.s32 %s75, 1
      %s77 = scalar_select %p74, %s75, %s76
      %p80 = pneg %p74
      %p81 = scmp.eq.s32.totalorder %s23, 1
      %p82 = por %p80, %p81
      %p83 = scmp.ne.s32.totalorder %s75, %s78
      %p84 = scmp.eq.s32.totalorder %s23, 0
      %p85 = por %p83, %p84
      %p86 = scmp.ne.s32.totalorder %s75, %s78
      %p87 = scmp.eq.s32.totalorder %s28, 1
      %p88 = por %p86, %p87
      %p89 = scmp.ne.s32.totalorder %s78, %s79
      %p90 = scmp.eq.s32.totalorder %s28, 0
      %p91 = por %p89, %p90
      %p92 = scmp.ne.s32.totalorder %s78, %s79
      %p93 = scmp.eq.s32.totalorder %s29, 1
      %p94 = por %p92, %p93
      %p96 = scmp.ne.s32.totalorder %s79, %s95
      %p97 = scmp.eq.s32.totalorder %s29, 0
      %p98 = por %p96, %p97
      %s99 = ssub.s32 %s30, %s42
      %p100 = scmp.eq.s32.totalorder %s99, 0
      %s102 = sadd.s32 %s101, 1
      %s103 = scalar_select %p100, %s101, %s102
      %p106 = pneg %p100
      %p107 = scmp.eq.s32.totalorder %s23, 1
      %p108 = por %p106, %p107
      %p109 = scmp.ne.s32.totalorder %s101, %s104
      %p110 = scmp.eq.s32.totalorder %s23, 0
      %p111 = por %p109, %p110
      %p112 = scmp.ne.s32.totalorder %s101, %s104
      %p113 = scmp.eq.s32.totalorder %s28, 1
      %p114 = por %p112, %p113
      %p115 = scmp.ne.s32.totalorder %s104, %s105
      %p116 = scmp.eq.s32.totalorder %s28, 0
      %p117 = por %p115, %p116
      %p118 = scmp.ne.s32.totalorder %s104, %s105
      %p119 = scmp.eq.s32.totalorder %s29, 1
      %p120 = por %p118, %p119
      %p122 = scmp.ne.s32.totalorder %s105, %s121
      %p123 = scmp.eq.s32.totalorder %s29, 0
      %p124 = por %p122, %p123
      %s125 = ssub.s32 %s30, %s42
      %p126 = scmp.eq.s32.totalorder %s125, 0
      %s128 = sadd.s32 %s127, 1
      %s129 = scalar_select %p126, %s127, %s128
      %p132 = pneg %p126
      %p133 = scmp.eq.s32.totalorder %s23, 1
      %p134 = por %p132, %p133
      %p135 = scmp.ne.s32.totalorder %s127, %s130
      %p136 = scmp.eq.s32.totalorder %s23, 0
      %p137 = por %p135, %p136
      %p138 = scmp.ne.s32.totalorder %s127, %s130
      %p139 = scmp.eq.s32.totalorder %s28, 1
      %p140 = por %p138, %p139
      %p141 = scmp.ne.s32.totalorder %s130, %s131
      %p142 = scmp.eq.s32.totalorder %s28, 0
      %p143 = por %p141, %p142
      %p144 = scmp.ne.s32.totalorder %s130, %s131
      %p145 = scmp.eq.s32.totalorder %s29, 1
      %p146 = por %p144, %p145
      %p148 = scmp.ne.s32.totalorder %s131, %s147
      %p149 = scmp.eq.s32.totalorder %s29, 0
      %p150 = por %p148, %p149
      %s151 = ssub.s32 %s30, %s42
      %p152 = scmp.eq.s32.totalorder %s151, 0
      %s154 = sadd.s32 %s153, 1
      %s155 = scalar_select %p152, %s153, %s154
      %p158 = pneg %p152
      %p159 = scmp.eq.s32.totalorder %s23, 1
      %p160 = por %p158, %p159
      %p161 = scmp.ne.s32.totalorder %s153, %s156
      %p162 = scmp.eq.s32.totalorder %s23, 0
      %p163 = por %p161, %p162
      %p164 = scmp.ne.s32.totalorder %s153, %s156
      %p165 = scmp.eq.s32.totalorder %s28, 1
      %p166 = por %p164, %p165
      %p167 = scmp.ne.s32.totalorder %s156, %s157
      %p168 = scmp.eq.s32.totalorder %s28, 0
      %p169 = por %p167, %p168
      %p170 = scmp.ne.s32.totalorder %s156, %s157
      %p171 = scmp.eq.s32.totalorder %s29, 1
      %p172 = por %p170, %p171
      %p174 = scmp.ne.s32.totalorder %s157, %s173
      %p175 = scmp.eq.s32.totalorder %s29, 0
      %p176 = por %p174, %p175
      %p177 = scmp.le.s32.totalorder 1, %s23
      %p178 = scmp.lt.s32.totalorder %s23, 3
      %p179 = pnand %p177, %p178
      %p180 = pneg %p179
      // Predicated region
      $region9: #{tpu_custom_call.1} parent=5 // pred_check
        _
      $region10: #{tpu_custom_call.1} parent=5 // pred_check_branch
        %182 = sbr.rel (%p179) target = $region12
      $region11: #{tpu_custom_call.1} parent=5 // pred_region
        %s183 = ssub.s32 %s23, 1
      $region12: #{tpu_custom_call.1} parent=5 // pred_fallthru
        _
      %p184 = scmp.lt.s32.totalorder %s23, 2
      // Predicated region
      $region13: #{tpu_custom_call.1} parent=5 // pred_check
        %p185 = pneg %p184
      $region14: #{tpu_custom_call.1} parent=5 // pred_check_branch
        %187 = sbr.rel (%p185) target = $region16
      $region15: #{tpu_custom_call.1} parent=5 // pred_region
        // Predicated region
        $region17: #{tpu_custom_call.1} parent=15 // pred_check
          %p188 = pneg %p57
        $region18: #{tpu_custom_call.1} parent=15 // pred_check_branch
          %190 = sbr.rel (%p188) target = $region20
        $region19: #{tpu_custom_call.1} parent=15 // pred_region
          %s191 = sand.u32 %s47, 1
          %s192 = scalar_lea.sflag [#allocation3], %s191
          %s193 = sand.u32 %s47, 1
          %s194 = smul.addr %s193, 8
          %s195 = scalar_lea.vmem [#allocation2], %s194
          %s196 = sadd.s32 %s30, %s31
          %s198 = ssub.s32 128, 128
          %199 = vsyncadd %s192, %s198
          %s200 = smul.addr %s196, 64
          %s201 = scalar_lea.hbm %s0, %s200
          %s202 = sshll.u32 %s195, 4
          %s203 = int_to_ptr.vmem [resolvable:$true] %s202
          %208 = dma.hbm_to_vmem [thread:$0]  %s201, 128, %s203, %s192, 128, 64, 4
        $region20: #{tpu_custom_call.1} parent=15 // pred_fallthru
          _
        // Predicated region
        $region21: #{tpu_custom_call.1} parent=15 // pred_check
          %p209 = pneg %p85
        $region22: #{tpu_custom_call.1} parent=15 // pred_check_branch
          %211 = sbr.rel (%p209) target = $region24
        $region23: #{tpu_custom_call.1} parent=15 // pred_region
          %s212 = sand.u32 %s75, 1
          %s213 = scalar_lea.sflag [#allocation6], %s212
          %s214 = sand.u32 %s75, 1
          %s215 = smul.addr %s214, 2
          %s216 = scalar_lea.vmem [#allocation5], %s215
          %s217 = sadd.s32 %s30, %s31
          %s219 = ssub.s32 32, 32
          %220 = vsyncadd %s213, %s219
          %s221 = smul.addr %s217, 32
          %s222 = scalar_lea.hbm %s1, %s221
          %s224 = sshll.u32 %s216, 4
          %s225 = int_to_ptr.vmem [resolvable:$true] %s224
          %227 = dma.hbm_to_vmem [thread:$0]  %s222, 32, %s225, %s213
        $region24: #{tpu_custom_call.1} parent=15 // pred_fallthru
          _
      $region16: #{tpu_custom_call.1} parent=5 // pred_fallthru
        _
      %p228 = scmp.le.s32.totalorder 1, %s23
      %p229 = scmp.lt.s32.totalorder %s23, 3
      %p230 = pnand %p228, %p229
      %p231 = pneg %p230
      // Predicated region
      $region25: #{tpu_custom_call.1} parent=5 // pred_check
        _
      $region26: #{tpu_custom_call.1} parent=5 // pred_check_branch
        %233 = sbr.rel (%p230) target = $region28
      $region27: #{tpu_custom_call.1} parent=5 // pred_region
        %s234 = ssub.s32 %s23, 1
        %s235 = sand.u32 %s50, 1
        %s236 = scalar_lea.sflag [#allocation3], %s235
        %s237 = sand.u32 %s50, 1
        %s238 = smul.addr %s237, 8
        %s239 = scalar_lea.vmem [#allocation2], %s238
        // Predicated region
        $region29: #{tpu_custom_call.1} parent=27 // pred_check
          %p240 = pneg %p63
        $region30: #{tpu_custom_call.1} parent=27 // pred_check_branch
          %242 = sbr.rel (%p240) target = $region32
        $region31: #{tpu_custom_call.1} parent=27 // pred_region
          %243 = dma.done %s236, 128
        $region32: #{tpu_custom_call.1} parent=27 // pred_fallthru
          _
        %s244 = sand.u32 %s78, 1
        %s245 = scalar_lea.sflag [#allocation6], %s244
        %s246 = sand.u32 %s78, 1
        %s247 = smul.addr %s246, 2
        %s248 = scalar_lea.vmem [#allocation5], %s247
        // Predicated region
        $region33: #{tpu_custom_call.1} parent=27 // pred_check
          %p249 = pneg %p91
        $region34: #{tpu_custom_call.1} parent=27 // pred_check_branch
          %251 = sbr.rel (%p249) target = $region36
        $region35: #{tpu_custom_call.1} parent=27 // pred_region
          %252 = dma.done %s245, 32
        $region36: #{tpu_custom_call.1} parent=27 // pred_fallthru
          _
        %s253 = sand.u32 %s50, 1
        %s254 = scalar_lea.sflag [#allocation3], %s253
        %s255 = sand.u32 %s50, 1
        %s256 = smul.addr %s255, 8
        %s257 = scalar_lea.vmem [#allocation2], %s256
        %p258 = pneg %p63
        %p259 = pneg %p60
        %s260 = sand.u32 %s78, 1
        %s261 = scalar_lea.sflag [#allocation6], %s260
        %s262 = sand.u32 %s78, 1
        %s263 = smul.addr %s262, 2
        %s264 = scalar_lea.vmem [#allocation5], %s263
        %p265 = pneg %p91
        %p266 = pneg %p88
        %p267 = pneg %p117
        %p268 = pneg %p114
        %p269 = scmp.lt.s32.totalorder %s32, 1
        %s270 = scalar_select %p269, %s32, 1
        %s271 = scalar_lea.vmem %s2, %s270
        %p272 = pneg %p143
        %p273 = pneg %p140
        %s274 = sand.u32 %s130, 1
        %s275 = scalar_lea.sflag [#allocation4], %s274
        %s276 = sand.u32 %s130, 1
        %s277 = smul.addr %s276, 2
        %s278 = scalar_lea.vmem [#allocation7], %s277
        %p279 = pneg %p169
        %p280 = pneg %p166
        %s281 = sand.u32 %s156, 1
        %s282 = scalar_lea.sflag [#allocation9], %s281
        %s283 = sand.u32 %s156, 1
        %s284 = smul.addr %s283, 2
        %s285 = scalar_lea.vmem [#allocation8], %s284
        %s286 = sadd.s32 %s32, %s33
        %s287 = sadd.s32 %s32, %s33
        %p288 = scmp.lt.s32.totalorder %s32, 1
        %s289 = scalar_select %p288, %s32, 1
        %s290 = scalar_lea.vmem %s2, %s289
        %p291 = scmp.eq.s32.totalorder %s33, 0
        // Predicated region
        $region37: #{tpu_custom_call.1} parent=27 // pred_check
          %p292 = pneg %p291
        $region38: #{tpu_custom_call.1} parent=27 // pred_check_branch
          %294 = sbr.rel (%p292) target = $region40
        $region39: #{tpu_custom_call.1} parent=27 // pred_region
          %vm295 = vcmask 0
          %296 = vst.msk [vmem:[%s290] sm:$0x1] %vm295, 0.0
          %vm297 = vcmask 25600
          %298 = vst.msk [vmem:[%s278] sm:$0x3] %vm297, 0.0
          %299 = vst.msk [vmem:[%s285] sm:$0x3] %vm297, 0.0
        $region40: #{tpu_custom_call.1} parent=27 // pred_fallthru
          _
        %v300 = vld [vmem:[%s239] sm:$0xf]
        %v301 = vld [vmem:[%s239 + $0x4] sm:$0xf]
        %v302 = vld [vmem:[%s248] sm:$0x3]
        %vm303 = vcmask 1043456
        %v304 = vsel %vm303, %v300, -inf
        %v305 = vrot.slane %v304, 4
        %v306 = vmax.f32 %v304, %v305
        %v307 = vrot.slane %v306, 2
        %v308 = vmax.f32 %v306, %v307
        %v309 = vrot.slane %v308, 1
        %v310 = vmax.f32 %v308, %v309
        %v311 = vsel %vm303, %v301, -inf
        %v312 = vrot.slane %v311, 4
        %v313 = vmax.f32 %v311, %v312
        %v314 = vrot.slane %v313, 2
        %v315 = vmax.f32 %v313, %v314
        %v316 = vrot.slane %v315, 1
        %v317 = vmax.f32 %v315, %v316
        %v318 = vsub.f32 %v300, %v310
        %v319 = vsub.f32 %v301, %v317
        %v320 = vmul.f32 %v318, 1.442695
        %v321 = vpow.pop %v320
        %v322 = vmul.f32 %v319, 1.442695
        %v323 = vpow.pop %v322
        %v324 = vsel %vm303, %v321, 0.0
        %v325 = vrot.slane %v324, 4
        %v326 = vadd.f32 %v324, %v325
        %v327 = vrot.slane %v326, 2
        %v328 = vadd.f32 %v326, %v327
        %v329 = vrot.slane %v328, 1
        %v330 = vadd.f32 %v328, %v329
        %v331 = vsel %vm303, %v323, 0.0
        %v332 = vrot.slane %v331, 4
        %v333 = vadd.f32 %v331, %v332
        %v334 = vrot.slane %v333, 2
        %v335 = vadd.f32 %v333, %v334
        %v336 = vrot.slane %v335, 1
        %v337 = vadd.f32 %v335, %v336
        %v338 = vrcp.pop %v330
        %v339 = vrcp.pop %v337
        %v340 = vmul.f32 %v330, %v338
        %v341 = vmul.f32 %v337, %v339
        %v342 = vsub.f32 2.0, %v340
        %v343 = vsub.f32 2.0, %v341
        %v344 = vmul.f32 %v338, %v342
        %v345 = vmul.f32 %v339, %v343
        %v346 = vmul.f32 %v321, %v344
        %v347 = vmul.f32 %v323, %v345
        %v348 = vlog2.pop %v330
        %v349 = vmul.f32 %v348, 0.6931472
        %v350 = vlog2.pop %v337
        %v351 = vmul.f32 %v350, 0.6931472
        %v352 = vlaneseq
        %v353 = vshrl.u32 %v352, 7
        %v355 = vunpack.c.l.s4 1966171168
        %v356 = vunpack.c.0.s8 %v355
        %v357 = vlaneseq
        %v358 = vshrl.u32 %v357, 7
        %v359 = vsub.s32 %v356, %v358
        %v360 = vrot.slane %v302, %v359
        %v361 = vcombine.high %v360, %v360
        %v363 = vunpack.c.l.s4 1966171168
        %v364 = vunpack.c.0.s8 %v363
        %v365 = vlaneseq
        %v366 = vshrl.u32 %v365, 7
        %v367 = vsub.s32 %v364, %v366
        %v368 = vrot.slane %v360, %v367
        %v370 = vunpack.c.l.s4 1966171168
        %v371 = vunpack.c.0.s8 %v370
        %v372 = vlaneseq
        %v373 = vshrl.u32 %v372, 7
        %v374 = vsub.s32 %v371, %v373
        %v375 = vrot.slane %v361, %v374
        %v376 = vlaneseq
        %v377 = vshrl.u32 %v376, 7
        %v378 = vsub.s32 0, %v377
        %v379 = vrot.slane %v368, %v378
        %v380 = vlaneseq
        %v381 = vshrl.u32 %v380, 7
        %v382 = vsub.s32 0, %v381
        %v383 = vrot.slane %v375, %v382
        %vm384 = vcmp.eq.s32.totalorder %v353, %v379
        %vm385 = vcmp.eq.s32.totalorder %v353, %v383
        %v386 = vmul.f32 %v346, %v346
        %v387 = vmul.f32 %v347, %v347
        %vm388 = vcmask 1040384
        %v389 = vsel %vm388, %v349, 0.0
        %v390 = vsel %vm388, %v351, 0.0
        %v391 = vadd.f32 %v389, %v390
        %392 = vadd.xlane.f32.xlu0 %v391
        %v393 = vpop.xlane.xlu0 %392
        %v394 = vrot.slane %v393, 4
        %v395 = vadd.f32 %v393, %v394
        %v396 = vrot.slane %v395, 2
        %v397 = vadd.f32 %v395, %v396
        %v398 = vrot.slane %v397, 1
        %v399 = vadd.f32 %v397, %v398
        %s400 = vtos %v399
        %v401 = vsel %vm384, %v318, 0.0
        %v402 = vsel %vm385, %v319, 0.0
        %v403 = vsel %vm303, %v401, 0.0
        %v404 = vsel %vm303, %v402, 0.0
        %v405 = vadd.f32 %v403, %v404
        %406 = vadd.xlane.f32.xlu0 %v405
        %v407 = vpop.xlane.xlu0 %406
        %v408 = vrot.slane %v407, 4
        %v409 = vadd.f32 %v407, %v408
        %v410 = vrot.slane %v409, 2
        %v411 = vadd.f32 %v409, %v410
        %v412 = vrot.slane %v411, 1
        %v413 = vadd.f32 %v411, %v412
        %s414 = vtos %v413
        %s415 = ssub.f32 %s400, %s414
        %v416 = vld [vmem:[%s290] sm:$0x1]
        %v417 = vstv %s415
        %v418 = vadd.f32 %v416, %v417
        %vm419 = vcmask 0
        %420 = vst.msk [vmem:[%s290] sm:$0x1] %vm419, %v418
        %v421 = vld [vmem:[%s278] sm:$0x3]
        %v422 = vsel %vm384, %v346, 0.0
        %v423 = vsel %vm385, %v347, 0.0
        %v424 = vsel %vm303, %v422, 0.0
        %425 = vadd.xlane.f32.xlu0 %v424
        %v426 = vpop.xlane.xlu0 %425
        %v427 = vsel %vm303, %v423, 0.0
        %428 = vadd.xlane.f32.xlu0 %v427
        %v429 = vpop.xlane.xlu0 %428
        %v432 = vlaneseq
        %v433 = vand.u32 %v432, 127
        %v434 = vlaneseq
        %v435 = vshrl.u32 %v434, 7
        %v436 = vsub.s32 %v433, %v435
        %v437 = vrot.slane %v426, %v436
        %v438 = vlaneseq
        %v439 = vshrl.u32 %v438, 7
        %v440 = vsub.s32 %v433, %v439
        %v441 = vrot.slane %v429, %v440
        %vm442 = vcmask 1041409
        %v443 = vsel %vm442, %v441, %v437
        %v445 = vadd.f32 %v421, %v443
        %vm446 = vcmask 25600
        %447 = vst.msk [vmem:[%s278] sm:$0x3] %vm446, %v445
        %v448 = vld [vmem:[%s285] sm:$0x3]
        %v449 = vsel %vm384, 1, 0
        %v450 = vsel %vm385, 1, 0
        %v451 = vcvt.s32.f32 %v449
        %v452 = vcvt.s32.f32 %v450
        %v453 = vadd.f32 %v386, %v451
        %v454 = vadd.f32 %v387, %v452
        %v455 = vsel %vm303, %v453, 0.0
        %456 = vadd.xlane.f32.xlu0 %v455
        %v457 = vpop.xlane.xlu0 %456
        %v458 = vsel %vm303, %v454, 0.0
        %459 = vadd.xlane.f32.xlu0 %v458
        %v460 = vpop.xlane.xlu0 %459
        %v463 = vlaneseq
        %v464 = vshrl.u32 %v463, 7
        %v465 = vsub.s32 %v433, %v464
        %v466 = vrot.slane %v457, %v465
        %v467 = vlaneseq
        %v468 = vshrl.u32 %v467, 7
        %v469 = vsub.s32 %v433, %v468
        %v470 = vrot.slane %v460, %v469
        %v471 = vsel %vm442, %v470, %v466
        %v473 = vadd.f32 %v448, %v471
        %474 = vst.msk [vmem:[%s285] sm:$0x3] %vm446, %v473
        %p475 = scmp.lt.s32.totalorder %s32, 1
        %s476 = scalar_select %p475, %s32, 1
        %s477 = scalar_lea.vmem %s2, %s476
        %s478 = sand.u32 %s130, 1
        %s479 = scalar_lea.sflag [#allocation4], %s478
        %s480 = sand.u32 %s130, 1
        %s481 = smul.addr %s480, 2
        %s482 = scalar_lea.vmem [#allocation7], %s481
        %s483 = sand.u32 %s156, 1
        %s484 = scalar_lea.sflag [#allocation9], %s483
        %s485 = sand.u32 %s156, 1
        %s486 = smul.addr %s485, 2
        %s487 = scalar_lea.vmem [#allocation8], %s486
        // Predicated region
        $region41: #{tpu_custom_call.1} parent=27 // pred_check
          %p488 = pneg %p114
        $region42: #{tpu_custom_call.1} parent=27 // pred_check_branch
          %490 = sbr.rel (%p488) target = $region44
        $region43: #{tpu_custom_call.1} parent=27 // pred_region
          _
        $region44: #{tpu_custom_call.1} parent=27 // pred_fallthru
          _
        // Predicated region
        $region45: #{tpu_custom_call.1} parent=27 // pred_check
          %p491 = pneg %p140
        $region46: #{tpu_custom_call.1} parent=27 // pred_check_branch
          %493 = sbr.rel (%p491) target = $region48
        $region47: #{tpu_custom_call.1} parent=27 // pred_region
          %s495 = ssub.s32 32, 32
          %496 = vsyncadd %s479, %s495
          %s497 = smul.addr %s32, 32
          %s498 = scalar_lea.hbm %s3, %s497
          %s500 = sshll.u32 %s482, 4
          %s501 = int_to_ptr.vmem [resolvable:$true] %s500
          %503 = dma.vmem_to_hbm [thread:$0]  %s501, 32, %s498, %s479
        $region48: #{tpu_custom_call.1} parent=27 // pred_fallthru
          _
        // Predicated region
        $region49: #{tpu_custom_call.1} parent=27 // pred_check
          %p504 = pneg %p166
        $region50: #{tpu_custom_call.1} parent=27 // pred_check_branch
          %506 = sbr.rel (%p504) target = $region52
        $region51: #{tpu_custom_call.1} parent=27 // pred_region
          %s508 = ssub.s32 32, 32
          %509 = vsyncadd %s484, %s508
          %s510 = smul.addr %s32, 32
          %s511 = scalar_lea.hbm %s4, %s510
          %s513 = sshll.u32 %s487, 4
          %s514 = int_to_ptr.vmem [resolvable:$true] %s513
          %516 = dma.vmem_to_hbm [thread:$0]  %s514, 32, %s511, %s484
        $region52: #{tpu_custom_call.1} parent=27 // pred_fallthru
          _
      $region28: #{tpu_custom_call.1} parent=5 // pred_fallthru
        _
      %p517 = scmp.le.s32.totalorder 2, %s23
      // Predicated region
      $region53: #{tpu_custom_call.1} parent=5 // pred_check
        %p518 = pneg %p517
      $region54: #{tpu_custom_call.1} parent=5 // pred_check_branch
        %520 = sbr.rel (%p518) target = $region56
      $region55: #{tpu_custom_call.1} parent=5 // pred_region
        %s521 = ssub.s32 %s23, 2
        // Predicated region
        $region57: #{tpu_custom_call.1} parent=55 // pred_check
          %p522 = pneg %p120
        $region58: #{tpu_custom_call.1} parent=55 // pred_check_branch
          %524 = sbr.rel (%p522) target = $region60
        $region59: #{tpu_custom_call.1} parent=55 // pred_region
          %p525 = scmp.lt.s32.totalorder %s34, 1
          %s526 = scalar_select %p525, %s34, 1
          %s527 = scalar_lea.vmem %s2, %s526
        $region60: #{tpu_custom_call.1} parent=55 // pred_fallthru
          _
        // Predicated region
        $region61: #{tpu_custom_call.1} parent=55 // pred_check
          %p528 = pneg %p146
        $region62: #{tpu_custom_call.1} parent=55 // pred_check_branch
          %530 = sbr.rel (%p528) target = $region64
        $region63: #{tpu_custom_call.1} parent=55 // pred_region
          %s531 = sand.u32 %s131, 1
          %s532 = scalar_lea.sflag [#allocation4], %s531
          %s533 = sand.u32 %s131, 1
          %s534 = smul.addr %s533, 2
          %s535 = scalar_lea.vmem [#allocation7], %s534
          %536 = dma.done %s532, 32
        $region64: #{tpu_custom_call.1} parent=55 // pred_fallthru
          _
        // Predicated region
        $region65: #{tpu_custom_call.1} parent=55 // pred_check
          %p537 = pneg %p172
        $region66: #{tpu_custom_call.1} parent=55 // pred_check_branch
          %539 = sbr.rel (%p537) target = $region68
        $region67: #{tpu_custom_call.1} parent=55 // pred_region
          %s540 = sand.u32 %s157, 1
          %s541 = scalar_lea.sflag [#allocation9], %s540
          %s542 = sand.u32 %s157, 1
          %s543 = smul.addr %s542, 2
          %s544 = scalar_lea.vmem [#allocation8], %s543
          %545 = dma.done %s541, 32
        $region68: #{tpu_custom_call.1} parent=55 // pred_fallthru
          _
      $region56: #{tpu_custom_call.1} parent=5 // pred_fallthru
        _
    $region6: #{tpu_custom_call.1} parent=1 // loop_footer
      %s27 = sadd.s32 1, %s23
    $region7: #{tpu_custom_call.1} parent=1 // loop_footer_branch
      %22 = sbr.rel target = $region3
    $region8: #{tpu_custom_call.1} parent=1 // loop_exit
      _
    %546 = vsyncpa [#allocation3], 1
    %s547 = scalar_lea.sflag [#allocation3], 1
    %548 = vsyncpa %s547, 1
    %549 = vsyncpa [#allocation6], 1
    %s550 = scalar_lea.sflag [#allocation6], 1
    %551 = vsyncpa %s550, 1
    %552 = vsyncpa [#allocation4], 1
    %s553 = scalar_lea.sflag [#allocation4], 1
    %554 = vsyncpa %s553, 1
    %555 = vsyncpa [#allocation9], 1
    %s556 = scalar_lea.sflag [#allocation9], 1
    %557 = vsyncpa %s556, 1

</llo_original>
